<compile_context>
chip_gen: v7x
topology: tpu7x:2x2x1
jax: 0.10.0
libtpu: 0.0.40
codegen_flags: <defaults>
</compile_context>

<pallas_src>
import jax
import jax.numpy as jnp
from jax.experimental import pallas as pl
from jax.experimental.pallas import tpu as pltpu


# ------------------------------ Pallas kernel -------------------------------

def _fused_upconcat_kernel(x_ref, d_ref, wx_ref, wd_ref, b_ref, o_ref):
    # x_ref : (tm, P*Cin)          packed input voxels
    # d_ref : (tm, P*8*Cout)       packed down-path features (blocked layout)
    # wx_ref: (P*Cin, P*8*Cout)    block-diag fused (deconv @ 1x1) weight
    # wd_ref: (P*8*Cout, P*8*Cout) block-diag 1x1 weight for the down half
    # b_ref : (1, P*8*Cout)        fused bias
    # o_ref : (tm, P*8*Cout)
    acc = jnp.dot(x_ref[...], wx_ref[...], preferred_element_type=jnp.float32)
    acc = acc + jnp.dot(d_ref[...], wd_ref[...], preferred_element_type=jnp.float32)
    o_ref[...] = (acc + b_ref[...]).astype(o_ref.dtype)


# ------------------------------ JAX wrappers ---------------------------------

def _pick_row_tile(rows, row_bytes, target_bytes=4 << 20):
    """Largest row tile whose dominant block stays within ~target_bytes (per buffer)."""
    tm = max(1, min(rows, target_bytes // max(row_bytes, 1)))
    if tm < rows:
        tm = max(8, (tm // 8) * 8)   # keep sublane-aligned blocks for partial grids
    return int(min(tm, rows))


def fused_upconcat(x2, down_b, wx, wa, bias):
    """Fused (deconv k=2 s=2) + concat + 1x1x1 conv, blocked layout.

    x2:     (M, Cin)      flattened input voxels (M = N*D*H*W)
    down_b: (M, 8*Cout)   down-path features, columns ordered (a, b, c, co)
    wx:     (Cin, 8*Cout) fused deconv@1x1 weight, same column order
    wa:     (Cout, Cout)  1x1 weight acting on the down channels
    bias:   (Cout,)       fused bias = b1 + b_dec @ wb
    returns out_b: (M, 8*Cout) in the same blocked layout.
    """
    M, Cin = x2.shape
    L = down_b.shape[1]            # 8 * Cout
    Cout = L // 8

    # Lane-packing factor: make block last dims a multiple of 128 when Cout is small.
    P = 1
    if L < 128 and 128 % L == 0 and M % (128 // L) == 0:
        P = 128 // L

    Mp = M // P
    xp = x2.reshape(Mp, P * Cin)          # free reshapes of contiguous buffers
    dp = down_b.reshape(Mp, P * L)

    wx_p = jnp.kron(jnp.eye(P, dtype=wx.dtype), wx)            # (P*Cin, P*L)
    wd_p = jnp.kron(jnp.eye(8 * P, dtype=wa.dtype), wa)        # (P*L,   P*L)
    b_p = jnp.tile(bias, 8 * P).reshape(1, P * L)

    tm = _pick_row_tile(Mp, P * L * 4)
    grid = (pl.cdiv(Mp, tm),)

    out_p = pl.pallas_call(
        _fused_upconcat_kernel,
        out_shape=jax.ShapeDtypeStruct((Mp, P * L), x2.dtype),
        grid=grid,
        in_specs=[
            pl.BlockSpec((tm, P * Cin), lambda i: (i, 0)),
            pl.BlockSpec((tm, P * L), lambda i: (i, 0)),
            pl.BlockSpec((P * Cin, P * L), lambda i: (0, 0)),
            pl.BlockSpec((P * L, P * L), lambda i: (0, 0)),
            pl.BlockSpec((1, P * L), lambda i: (0, 0)),
        ],
        out_specs=pl.BlockSpec((tm, P * L), lambda i: (i, 0)),
        compiler_params=pltpu.CompilerParams(
            dimension_semantics=("parallel",)),
    )(xp, dp, wx_p, wd_p, b_p)

    return out_p.reshape(M, L)


def compup_concat3d(inputs_ncdhw, down_ncdhw, params):
    """Full module forward with the PyTorch NCDHW I/O convention.

    params:
      w_dec: (Cin, Cout, 2, 2, 2)  ConvTranspose3d weight (PyTorch layout)
      b_dec: (Cout,)
      w1:    (Cout, 2*Cout)        Conv3d 1x1x1 weight with spatial dims squeezed
      b1:    (Cout,)
    """
    w_dec, b_dec, w1, b1 = params["w_dec"], params["b_dec"], params["w1"], params["b1"]
    N, Cin, D, H, W = inputs_ncdhw.shape
    Cout = w_dec.shape[1]
    M = N * D * H * W

    # ---- fold the 1x1x1 conv into the deconv (tiny weights, done once, f32) ----
    wa = w1[:, :Cout].T                        # acts on down channels (concat = [down, y])
    wb = w1[:, Cout:].T                        # acts on deconv channels
    # wx[ci, (a,b,c,co)] = sum_j w_dec[ci, j, a, b, c] * wb[j, co]
    wx = jnp.einsum('ijabc,jo->iabco', w_dec, wb).reshape(Cin, 8 * Cout)
    bias = b1 + b_dec @ wb                     # deconv bias passes through the 1x1 conv

    # ---- one boundary transpose per big tensor (forced by the NCDHW interface) ----
    x2 = jnp.transpose(inputs_ncdhw, (0, 2, 3, 4, 1)).reshape(M, Cin)
    down_b = jnp.transpose(
        down_ncdhw.reshape(N, Cout, D, 2, H, 2, W, 2),
        (0, 2, 4, 6, 3, 5, 7, 1)).reshape(M, 8 * Cout)

    out_b = fused_upconcat(x2, down_b, wx, wa, bias)

    out = jnp.transpose(
        out_b.reshape(N, D, H, W, 2, 2, 2, Cout),
        (0, 7, 1, 4, 2, 5, 3, 6)).reshape(N, Cout, 2 * D, 2 * H, 2 * W)
    return out


# -------------------------------- reference -----------------------------------

def ref_forward(x, down, w_dec, b_dec, w1, b1):
    """Pure-JAX NCDHW reference mirroring the PyTorch definition."""
    N, Cin, D, H, W = x.shape
    Cout = w_dec.shape[1]
    # ConvTranspose3d k=2 s=2: scatter independent 2x2x2 blocks.
    y = jnp.einsum('ncdhw,coabe->nodahbwe', x, w_dec)
    y = y.reshape(N, Cout, 2 * D, 2 * H, 2 * W) + b_dec[None, :, None, None, None]
    cat = jnp.concatenate([down, y], axis=1)
    out = jnp.einsum('ncdhw,oc->nodhw', cat, w1) + b1[None, :, None, None, None]
    return out


# ----------------------------------- main --------------------------------------

if __name__ == "__main__":
    in_ch, out_ch = 4, 8
    N, D, H, W = 2, 8, 8, 8

    key = jax.random.PRNGKey(0)
    k1, k2, k3, k4, k5, k6 = jax.random.split(key, 6)

    # Deterministic "module parameters" (PyTorch layouts, squeezed where trivial).
    w_dec = jax.random.normal(k1, (in_ch, out_ch, 2, 2, 2), jnp.float32) * 0.1
    b_dec = jax.random.normal(k2, (out_ch,), jnp.float32) * 0.1
    w1 = jax.random.normal(k3, (out_ch, 2 * out_ch), jnp.float32) * 0.1
    b1 = jax.random.normal(k4, (out_ch,), jnp.float32) * 0.1
    params = {"w_dec": w_dec, "b_dec": b_dec, "w1": w1, "b1": b1}

    inputs = jax.random.normal(k5, (N, in_ch, D, H, W), jnp.float32)
    down_outputs = jax.random.normal(k6, (N, out_ch, 2 * D, 2 * H, 2 * W), jnp.float32)

    fwd = jax.jit(lambda a, b: compup_concat3d(a, b, params))
    out = jax.block_until_ready(fwd(inputs, down_outputs))

    ref = ref_forward(inputs, down_outputs, w_dec, b_dec, w1, b1)
    assert out.shape == (N, out_ch, 2 * D, 2 * H, 2 * W)
    assert jnp.allclose(out, ref, atol=2e-5, rtol=2e-5), "mismatch vs reference"

    print("KERNEL_OK")
</pallas_src>

<mosaic_0001>
module attributes {stable_mosaic.version = 11 : i64} {
  func.func @_fused_upconcat_kernel(%arg0: i32, %arg1: memref<512x8xf32, #tpu.memory_space<vmem>>, %arg2: memref<512x128xf32, #tpu.memory_space<vmem>>, %arg3: memref<8x128xf32, #tpu.memory_space<vmem>>, %arg4: memref<128x128xf32, #tpu.memory_space<vmem>>, %arg5: memref<1x128xf32, #tpu.memory_space<vmem>>, %arg6: memref<512x128xf32, #tpu.memory_space<vmem>>) attributes {dimension_semantics = [#tpu.dimension_semantics<parallel>], iteration_bounds = array<i64: 1>, scalar_prefetch = 0 : i64, scratch_operands = 0 : i64, tpu.core_type = #tpu.core_type<tc>, window_params = [{transform_indices = @transform_0, window_bounds = array<i64: 512, 8>}, {transform_indices = @transform_1, window_bounds = array<i64: 512, 128>}, {pipeline_mode = #tpu.pipeline_mode<synchronous>, transform_indices = @transform_2, window_bounds = array<i64: 8, 128>}, {pipeline_mode = #tpu.pipeline_mode<synchronous>, transform_indices = @transform_3, window_bounds = array<i64: 128, 128>}, {pipeline_mode = #tpu.pipeline_mode<synchronous>, transform_indices = @transform_4, window_bounds = array<i64: 1, 128>}, {transform_indices = @transform_5, window_bounds = array<i64: 512, 128>}]} {
    %c0 = arith.constant 0 : index
    %c0_0 = arith.constant 0 : index
    %0 = vector.load %arg1[%c0, %c0_0] : memref<512x8xf32, #tpu.memory_space<vmem>>, vector<512x8xf32>
    %c0_1 = arith.constant 0 : index
    %c0_2 = arith.constant 0 : index
    %1 = vector.load %arg3[%c0_1, %c0_2] : memref<8x128xf32, #tpu.memory_space<vmem>>, vector<8x128xf32>
    %cst = arith.constant dense<0.000000e+00> : vector<512x128xf32>
    %2 = tpu.matmul %0, %1, %cst {dimension_numbers = #tpu.dot_dimension_numbers<[1], [0], [0], [1], [0, 0, 1, 1], [], []>} : vector<512x8xf32>, vector<8x128xf32>, vector<512x128xf32> -> vector<512x128xf32>
    %c0_3 = arith.constant 0 : index
    %c0_4 = arith.constant 0 : index
    %3 = vector.load %arg2[%c0_3, %c0_4] : memref<512x128xf32, #tpu.memory_space<vmem>>, vector<512x128xf32>
    %c0_5 = arith.constant 0 : index
    %c0_6 = arith.constant 0 : index
    %4 = vector.load %arg4[%c0_5, %c0_6] : memref<128x128xf32, #tpu.memory_space<vmem>>, vector<128x128xf32>
    %cst_7 = arith.constant dense<0.000000e+00> : vector<512x128xf32>
    %5 = tpu.matmul %3, %4, %cst_7 {dimension_numbers = #tpu.dot_dimension_numbers<[1], [0], [0], [1], [0, 0, 1, 1], [], []>} : vector<512x128xf32>, vector<128x128xf32>, vector<512x128xf32> -> vector<512x128xf32>
    %6 = arith.addf %2, %5 : vector<512x128xf32>
    %c0_8 = arith.constant 0 : index
    %c0_9 = arith.constant 0 : index
    %7 = vector.load %arg5[%c0_8, %c0_9] : memref<1x128xf32, #tpu.memory_space<vmem>>, vector<1x128xf32>
    %8 = vector.broadcast %7 : vector<1x128xf32> to vector<512x128xf32>
    %9 = arith.addf %6, %8 : vector<512x128xf32>
    %c0_10 = arith.constant 0 : index
    %c0_11 = arith.constant 0 : index
    %10 = vector.load %arg6[%c0_10, %c0_11] : memref<512x128xf32, #tpu.memory_space<vmem>>, vector<512x128xf32>
    tpu.vector_store %arg6[%c0_10, %c0_11], %9 {strides = array<i32>} : memref<512x128xf32, #tpu.memory_space<vmem>>, vector<512x128xf32>,
    return
  }
  func.func @transform_0(%arg0: i32) -> (i32, i32) {
    %c0_i32 = arith.constant 0 : i32
    %c0_i32_0 = arith.constant 0 : i32
    return %arg0, %c0_i32 : i32, i32
  }
  func.func @transform_1(%arg0: i32) -> (i32, i32) {
    %c0_i32 = arith.constant 0 : i32
    %c0_i32_0 = arith.constant 0 : i32
    return %arg0, %c0_i32 : i32, i32
  }
  func.func @transform_2(%arg0: i32) -> (i32, i32) {
    %c0_i32 = arith.constant 0 : i32
    %c0_i32_0 = arith.constant 0 : i32
    %c0_i32_1 = arith.constant 0 : i32
    return %c0_i32, %c0_i32_0 : i32, i32
  }
  func.func @transform_3(%arg0: i32) -> (i32, i32) {
    %c0_i32 = arith.constant 0 : i32
    %c0_i32_0 = arith.constant 0 : i32
    %c0_i32_1 = arith.constant 0 : i32
    return %c0_i32, %c0_i32_0 : i32, i32
  }
  func.func @transform_4(%arg0: i32) -> (i32, i32) {
    %c0_i32 = arith.constant 0 : i32
    %c0_i32_0 = arith.constant 0 : i32
    %c0_i32_1 = arith.constant 0 : i32
    return %c0_i32, %c0_i32_0 : i32, i32
  }
  func.func @transform_5(%arg0: i32) -> (i32, i32) {
    %c0_i32 = arith.constant 0 : i32
    %c0_i32_0 = arith.constant 0 : i32
    return %arg0, %c0_i32 : i32, i32
  }
}

</mosaic_0001>

<llo_original>
// kernel: tile.8
$region0: #{tile.8}
  #allocation0 [shape = 's32[1]{0}', space=sflag, size = 0x4, scoped, tag = 'scoped memory for tile.8']
  %s0 = inlined_call_operand.vmem [shape: f32[8], index: 0, kind: input, shape index: {}]
  %s1 = inlined_call_operand.vmem [shape: f32[16,8], index: 1, kind: output, shape index: {}]
  // Predicated region
  $region2: #{tile.8} parent=0 // pred_check
    _
  $region3: #{tile.8} parent=0 // pred_check_branch
    %3 = sbr.rel (0) target = $region5
  $region4: #{tile.8} parent=0 // pred_region
    _
  $region5: #{tile.8} parent=0 // pred_fallthru
    _
  %v4 = vld [vmem:[%s0] ss:$0 sm:$0xff]
  %5 = vst [vmem:[%s1] sm:$0xff] %v4
  %s6 = scalar_lea.vmem %s1, 8
  %7 = vst [vmem:[%s6] sm:$0xff] %v4

// kernel: tile.9
$region0: #{tile.9}
  %s0 = inlined_call_operand.vmem [shape: f32[16,8], index: 0, kind: input, shape index: {}]
  %s1 = inlined_call_operand.vmem [shape: f32[1,128], index: 1, kind: output, shape index: {}]
  $region1: #{tile.9} parent=0
    #allocation0 [shape = 'u8[4096]{0}', space=vmem, size = 0x1000, scoped, tag = 'scoped mem for output reshape']
    %v2 = vld [vmem:[%s0] sm:$0x1]
    %vm3 = vcmask 64512
    %4 = vst.msk [vmem:[#allocation0] sm:$0x1] %vm3, %v2
    %s5 = scalar_lea.vmem %s0, 15
    %v6 = vld [vmem:[%s5] sm:$0x1]
    %7 = vrot.lane.b32.xlu0 %v6, 120
    %v8 = vpop.permute.xlu0 %7
    %vm9 = vcmask 1048512
    %10 = vst.msk [vmem:[#allocation0] sm:$0x1] %vm9, %v8
    %s11 = scalar_lea.vmem %s0, 14
    %v12 = vld [vmem:[%s11] sm:$0x1]
    %13 = vrot.lane.b32.xlu0 %v12, 112
    %v14 = vpop.permute.xlu0 %13
    %vm15 = vcmask 982912
    %16 = vst.msk [vmem:[#allocation0] sm:$0x1] %vm15, %v14
    %s17 = scalar_lea.vmem %s0, 13
    %v18 = vld [vmem:[%s17] sm:$0x1]
    %19 = vrot.lane.b32.xlu0 %v18, 104
    %v20 = vpop.permute.xlu0 %19
    %vm21 = vcmask 917312
    %22 = vst.msk [vmem:[#allocation0] sm:$0x1] %vm21, %v20
    %s23 = scalar_lea.vmem %s0, 12
    %v24 = vld [vmem:[%s23] sm:$0x1]
    %25 = vrot.lane.b32.xlu0 %v24, 96
    %v26 = vpop.permute.xlu0 %25
    %vm27 = vcmask 851712
    %28 = vst.msk [vmem:[#allocation0] sm:$0x1] %vm27, %v26
    %s29 = scalar_lea.vmem %s0, 11
    %v30 = vld [vmem:[%s29] sm:$0x1]
    %31 = vrot.lane.b32.xlu0 %v30, 88
    %v32 = vpop.permute.xlu0 %31
    %vm33 = vcmask 786112
    %34 = vst.msk [vmem:[#allocation0] sm:$0x1] %vm33, %v32
    %s35 = scalar_lea.vmem %s0, 10
    %v36 = vld [vmem:[%s35] sm:$0x1]
    %37 = vrot.lane.b32.xlu0 %v36, 80
    %v38 = vpop.permute.xlu0 %37
    %vm39 = vcmask 720512
    %40 = vst.msk [vmem:[#allocation0] sm:$0x1] %vm39, %v38
    %s41 = scalar_lea.vmem %s0, 9
    %v42 = vld [vmem:[%s41] sm:$0x1]
    %43 = vrot.lane.b32.xlu0 %v42, 72
    %v44 = vpop.permute.xlu0 %43
    %vm45 = vcmask 654912
    %46 = vst.msk [vmem:[#allocation0] sm:$0x1] %vm45, %v44
    %s47 = scalar_lea.vmem %s0, 8
    %v48 = vld [vmem:[%s47] sm:$0x1]
    %49 = vrot.lane.b32.xlu0 %v48, 64
    %v50 = vpop.permute.xlu0 %49
    %vm51 = vcmask 589312
    %52 = vst.msk [vmem:[#allocation0] sm:$0x1] %vm51, %v50
    %s53 = scalar_lea.vmem %s0, 7
    %v54 = vld [vmem:[%s53] sm:$0x1]
    %55 = vrot.lane.b32.xlu0 %v54, 56
    %v56 = vpop.permute.xlu0 %55
    %vm57 = vcmask 523712
    %58 = vst.msk [vmem:[#allocation0] sm:$0x1] %vm57, %v56
    %s59 = scalar_lea.vmem %s0, 6
    %v60 = vld [vmem:[%s59] sm:$0x1]
    %61 = vrot.lane.b32.xlu0 %v60, 48
    %v62 = vpop.permute.xlu0 %61
    %vm63 = vcmask 458112
    %64 = vst.msk [vmem:[#allocation0] sm:$0x1] %vm63, %v62
    %s65 = scalar_lea.vmem %s0, 5
    %v66 = vld [vmem:[%s65] sm:$0x1]
    %67 = vrot.lane.b32.xlu0 %v66, 40
    %v68 = vpop.permute.xlu0 %67
    %vm69 = vcmask 392512
    %70 = vst.msk [vmem:[#allocation0] sm:$0x1] %vm69, %v68
    %s71 = scalar_lea.vmem %s0, 4
    %v72 = vld [vmem:[%s71] sm:$0x1]
    %73 = vrot.lane.b32.xlu0 %v72, 32
    %v74 = vpop.permute.xlu0 %73
    %vm75 = vcmask 326912
    %76 = vst.msk [vmem:[#allocation0] sm:$0x1] %vm75, %v74
    %s77 = scalar_lea.vmem %s0, 3
    %v78 = vld [vmem:[%s77] sm:$0x1]
    %79 = vrot.lane.b32.xlu0 %v78, 24
    %v80 = vpop.permute.xlu0 %79
    %vm81 = vcmask 261312
    %82 = vst.msk [vmem:[#allocation0] sm:$0x1] %vm81, %v80
    %s83 = scalar_lea.vmem %s0, 2
    %v84 = vld [vmem:[%s83] sm:$0x1]
    %85 = vrot.lane.b32.xlu0 %v84, 16
    %v86 = vpop.permute.xlu0 %85
    %vm87 = vcmask 195712
    %88 = vst.msk [vmem:[#allocation0] sm:$0x1] %vm87, %v86
    %s89 = scalar_lea.vmem %s0, 1
    %v90 = vld [vmem:[%s89] sm:$0x1]
    %91 = vrot.lane.b32.xlu0 %v90, 8
    %v92 = vpop.permute.xlu0 %91
    %vm93 = vcmask 130112
    %94 = vst.msk [vmem:[#allocation0] sm:$0x1] %vm93, %v92
    %s96 = sshllo.u32 0, 1
    %v98 = vld [vmem:[#allocation0] sm:%s96]
    %s99 = sshllo.u32 0, 1
    %100 = vst [vmem:[%s1] sm:%s99] %v98

// kernel: _lambda_.1
$region0: #{_lambda_.1}
  #allocation0 [shape = 'u32[]', space=smem, size = 0x4, offset = 0x4, fixed_abs, tag = 'smem constant byte address 0x4 - core index']
  #allocation1 [shape = 'u32[144,128]{1,0:T(1,128)}', space=vmem, size = 0x12000, scoped, tag = 'internal scratch']
  %s0 = inlined_call_operand.vmem [shape: f32[512,8], index: 0, kind: input, shape index: {}]
  %s1 = inlined_call_operand.vmem [shape: f32[512,128], index: 1, kind: input, shape index: {}]
  %s2 = inlined_call_operand.vmem [shape: f32[8,128], index: 2, kind: input, shape index: {}]
  %s3 = inlined_call_operand.vmem [shape: f32[128,128], index: 3, kind: input, shape index: {}]
  %s4 = inlined_call_operand.vmem [shape: f32[1,128], index: 4, kind: input, shape index: {}]
  %s5 = inlined_call_operand.vmem [shape: f32[512,128], index: 5, kind: output, shape index: {}]
  %s6 = sld [smem:[#allocation0]]
  $region30: #{_lambda_.1} parent=0
    _
  %s8 = ssub.s32 1, %s6
  %s9 = scalar_select 0, %s8, %s6
  // Predicated region
  $region2: #{_lambda_.1} parent=0 // pred_check
    _
  $region3: #{_lambda_.1} parent=0 // pred_check_branch
    %11 = sbr.rel (0) target = $region5
  $region4: #{_lambda_.1} parent=0 // pred_region
    _
  $region5: #{_lambda_.1} parent=0 // pred_fallthru
    _
  // Predicated region
  $region6: #{_lambda_.1} parent=0 // pred_check
    _
  $region7: #{_lambda_.1} parent=0 // pred_check_branch
    %13 = sbr.rel (0) target = $region9
  $region8: #{_lambda_.1} parent=0 // pred_region
    _
  $region9: #{_lambda_.1} parent=0 // pred_fallthru
    _
  // Predicated region
  $region10: #{_lambda_.1} parent=0 // pred_check
    _
  $region11: #{_lambda_.1} parent=0 // pred_check_branch
    %15 = sbr.rel (0) target = $region13
  $region12: #{_lambda_.1} parent=0 // pred_region
    _
  $region13: #{_lambda_.1} parent=0 // pred_fallthru
    _
  // Predicated region
  $region14: #{_lambda_.1} parent=0 // pred_check
    _
  $region15: #{_lambda_.1} parent=0 // pred_check_branch
    %17 = sbr.rel (0) target = $region17
  $region16: #{_lambda_.1} parent=0 // pred_region
    _
  $region17: #{_lambda_.1} parent=0 // pred_fallthru
    _
  // Predicated region
  $region18: #{_lambda_.1} parent=0 // pred_check
    _
  $region19: #{_lambda_.1} parent=0 // pred_check_branch
    %19 = sbr.rel (0) target = $region21
  $region20: #{_lambda_.1} parent=0 // pred_region
    _
  $region21: #{_lambda_.1} parent=0 // pred_fallthru
    _
  %v20 = vld [vmem:[%s0] sm:$0xff]
  %v21 = vld [vmem:[%s0 + $0x8] sm:$0xff]
  %v22 = vld [vmem:[%s0 + $0x10] sm:$0xff]
  %v23 = vld [vmem:[%s0 + $0x18] sm:$0xff]
  %v24 = vld [vmem:[%s0 + $0x20] sm:$0xff]
  %v25 = vld [vmem:[%s0 + $0x28] sm:$0xff]
  %v26 = vld [vmem:[%s0 + $0x30] sm:$0xff]
  %v27 = vld [vmem:[%s0 + $0x38] sm:$0xff]
  %v28 = vld [vmem:[%s0 + $0x40] sm:$0xff]
  %v29 = vld [vmem:[%s0 + $0x48] sm:$0xff]
  %v30 = vld [vmem:[%s0 + $0x50] sm:$0xff]
  %v31 = vld [vmem:[%s0 + $0x58] sm:$0xff]
  %v32 = vld [vmem:[%s0 + $0x60] sm:$0xff]
  %v33 = vld [vmem:[%s0 + $0x68] sm:$0xff]
  %v34 = vld [vmem:[%s0 + $0x70] sm:$0xff]
  %v35 = vld [vmem:[%s0 + $0x78] sm:$0xff]
  %v36 = vld [vmem:[%s0 + $0x80] sm:$0xff]
  %v37 = vld [vmem:[%s0 + $0x88] sm:$0xff]
  %v38 = vld [vmem:[%s0 + $0x90] sm:$0xff]
  %v39 = vld [vmem:[%s0 + $0x98] sm:$0xff]
  %v40 = vld [vmem:[%s0 + $0xa0] sm:$0xff]
  %v41 = vld [vmem:[%s0 + $0xa8] sm:$0xff]
  %v42 = vld [vmem:[%s0 + $0xb0] sm:$0xff]
  %v43 = vld [vmem:[%s0 + $0xb8] sm:$0xff]
  %v44 = vld [vmem:[%s0 + $0xc0] sm:$0xff]
  %v45 = vld [vmem:[%s0 + $0xc8] sm:$0xff]
  %v46 = vld [vmem:[%s0 + $0xd0] sm:$0xff]
  %v47 = vld [vmem:[%s0 + $0xd8] sm:$0xff]
  %v48 = vld [vmem:[%s0 + $0xe0] sm:$0xff]
  %v49 = vld [vmem:[%s0 + $0xe8] sm:$0xff]
  %v50 = vld [vmem:[%s0 + $0xf0] sm:$0xff]
  %v51 = vld [vmem:[%s0 + $0xf8] sm:$0xff]
  %v52 = vld [vmem:[%s0 + $0x100] sm:$0xff]
  %v53 = vld [vmem:[%s0 + $0x108] sm:$0xff]
  %v54 = vld [vmem:[%s0 + $0x110] sm:$0xff]
  %v55 = vld [vmem:[%s0 + $0x118] sm:$0xff]
  %v56 = vld [vmem:[%s0 + $0x120] sm:$0xff]
  %v57 = vld [vmem:[%s0 + $0x128] sm:$0xff]
  %v58 = vld [vmem:[%s0 + $0x130] sm:$0xff]
  %v59 = vld [vmem:[%s0 + $0x138] sm:$0xff]
  %v60 = vld [vmem:[%s0 + $0x140] sm:$0xff]
  %v61 = vld [vmem:[%s0 + $0x148] sm:$0xff]
  %v62 = vld [vmem:[%s0 + $0x150] sm:$0xff]
  %v63 = vld [vmem:[%s0 + $0x158] sm:$0xff]
  %v64 = vld [vmem:[%s0 + $0x160] sm:$0xff]
  %v65 = vld [vmem:[%s0 + $0x168] sm:$0xff]
  %v66 = vld [vmem:[%s0 + $0x170] sm:$0xff]
  %v67 = vld [vmem:[%s0 + $0x178] sm:$0xff]
  %v68 = vld [vmem:[%s0 + $0x180] sm:$0xff]
  %v69 = vld [vmem:[%s0 + $0x188] sm:$0xff]
  %v70 = vld [vmem:[%s0 + $0x190] sm:$0xff]
  %v71 = vld [vmem:[%s0 + $0x198] sm:$0xff]
  %v72 = vld [vmem:[%s0 + $0x1a0] sm:$0xff]
  %v73 = vld [vmem:[%s0 + $0x1a8] sm:$0xff]
  %v74 = vld [vmem:[%s0 + $0x1b0] sm:$0xff]
  %v75 = vld [vmem:[%s0 + $0x1b8] sm:$0xff]
  %v76 = vld [vmem:[%s0 + $0x1c0] sm:$0xff]
  %v77 = vld [vmem:[%s0 + $0x1c8] sm:$0xff]
  %v78 = vld [vmem:[%s0 + $0x1d0] sm:$0xff]
  %v79 = vld [vmem:[%s0 + $0x1d8] sm:$0xff]
  %v80 = vld [vmem:[%s0 + $0x1e0] sm:$0xff]
  %v81 = vld [vmem:[%s0 + $0x1e8] sm:$0xff]
  %v82 = vld [vmem:[%s0 + $0x1f0] sm:$0xff]
  %v83 = vld [vmem:[%s0 + $0x1f8] sm:$0xff]
  %v84 = vld [vmem:[%s2] sm:$0xff]
  %v85 = vld [vmem:[%s1] sm:$0xff]
  %v86 = vld [vmem:[%s1 + $0x8] sm:$0xff]
  %v87 = vld [vmem:[%s1 + $0x10] sm:$0xff]
  %v88 = vld [vmem:[%s1 + $0x18] sm:$0xff]
  %v89 = vld [vmem:[%s1 + $0x20] sm:$0xff]
  %v90 = vld [vmem:[%s1 + $0x28] sm:$0xff]
  %v91 = vld [vmem:[%s1 + $0x30] sm:$0xff]
  %v92 = vld [vmem:[%s1 + $0x38] sm:$0xff]
  %v93 = vld [vmem:[%s1 + $0x40] sm:$0xff]
  %v94 = vld [vmem:[%s1 + $0x48] sm:$0xff]
  %v95 = vld [vmem:[%s1 + $0x50] sm:$0xff]
  %v96 = vld [vmem:[%s1 + $0x58] sm:$0xff]
  %v97 = vld [vmem:[%s1 + $0x60] sm:$0xff]
  %v98 = vld [vmem:[%s1 + $0x68] sm:$0xff]
  %v99 = vld [vmem:[%s1 + $0x70] sm:$0xff]
  %v100 = vld [vmem:[%s1 + $0x78] sm:$0xff]
  %v101 = vld [vmem:[%s1 + $0x80] sm:$0xff]
  %v102 = vld [vmem:[%s1 + $0x88] sm:$0xff]
  %v103 = vld [vmem:[%s1 + $0x90] sm:$0xff]
  %v104 = vld [vmem:[%s1 + $0x98] sm:$0xff]
  %v105 = vld [vmem:[%s1 + $0xa0] sm:$0xff]
  %v106 = vld [vmem:[%s1 + $0xa8] sm:$0xff]
  %v107 = vld [vmem:[%s1 + $0xb0] sm:$0xff]
  %v108 = vld [vmem:[%s1 + $0xb8] sm:$0xff]
  %v109 = vld [vmem:[%s1 + $0xc0] sm:$0xff]
  %v110 = vld [vmem:[%s1 + $0xc8] sm:$0xff]
  %v111 = vld [vmem:[%s1 + $0xd0] sm:$0xff]
  %v112 = vld [vmem:[%s1 + $0xd8] sm:$0xff]
  %v113 = vld [vmem:[%s1 + $0xe0] sm:$0xff]
  %v114 = vld [vmem:[%s1 + $0xe8] sm:$0xff]
  %v115 = vld [vmem:[%s1 + $0xf0] sm:$0xff]
  %v116 = vld [vmem:[%s1 + $0xf8] sm:$0xff]
  %v117 = vld [vmem:[%s1 + $0x100] sm:$0xff]
  %v118 = vld [vmem:[%s1 + $0x108] sm:$0xff]
  %v119 = vld [vmem:[%s1 + $0x110] sm:$0xff]
  %v120 = vld [vmem:[%s1 + $0x118] sm:$0xff]
  %v121 = vld [vmem:[%s1 + $0x120] sm:$0xff]
  %v122 = vld [vmem:[%s1 + $0x128] sm:$0xff]
  %v123 = vld [vmem:[%s1 + $0x130] sm:$0xff]
  %v124 = vld [vmem:[%s1 + $0x138] sm:$0xff]
  %v125 = vld [vmem:[%s1 + $0x140] sm:$0xff]
  %v126 = vld [vmem:[%s1 + $0x148] sm:$0xff]
  %v127 = vld [vmem:[%s1 + $0x150] sm:$0xff]
  %v128 = vld [vmem:[%s1 + $0x158] sm:$0xff]
  %v129 = vld [vmem:[%s1 + $0x160] sm:$0xff]
  %v130 = vld [vmem:[%s1 + $0x168] sm:$0xff]
  %v131 = vld [vmem:[%s1 + $0x170] sm:$0xff]
  %v132 = vld [vmem:[%s1 + $0x178] sm:$0xff]
  %v133 = vld [vmem:[%s1 + $0x180] sm:$0xff]
  %v134 = vld [vmem:[%s1 + $0x188] sm:$0xff]
  %v135 = vld [vmem:[%s1 + $0x190] sm:$0xff]
  %v136 = vld [vmem:[%s1 + $0x198] sm:$0xff]
  %v137 = vld [vmem:[%s1 + $0x1a0] sm:$0xff]
  %v138 = vld [vmem:[%s1 + $0x1a8] sm:$0xff]
  %v139 = vld [vmem:[%s1 + $0x1b0] sm:$0xff]
  %v140 = vld [vmem:[%s1 + $0x1b8] sm:$0xff]
  %v141 = vld [vmem:[%s1 + $0x1c0] sm:$0xff]
  %v142 = vld [vmem:[%s1 + $0x1c8] sm:$0xff]
  %v143 = vld [vmem:[%s1 + $0x1d0] sm:$0xff]
  %v144 = vld [vmem:[%s1 + $0x1d8] sm:$0xff]
  %v145 = vld [vmem:[%s1 + $0x1e0] sm:$0xff]
  %v146 = vld [vmem:[%s1 + $0x1e8] sm:$0xff]
  %v147 = vld [vmem:[%s1 + $0x1f0] sm:$0xff]
  %v148 = vld [vmem:[%s1 + $0x1f8] sm:$0xff]
  %v149 = vld [vmem:[%s3] sm:$0xff]
  %v150 = vld [vmem:[%s3 + $0x8] sm:$0xff]
  %v151 = vld [vmem:[%s3 + $0x10] sm:$0xff]
  %v152 = vld [vmem:[%s3 + $0x18] sm:$0xff]
  %v153 = vld [vmem:[%s3 + $0x20] sm:$0xff]
  %v154 = vld [vmem:[%s3 + $0x28] sm:$0xff]
  %v155 = vld [vmem:[%s3 + $0x30] sm:$0xff]
  %v156 = vld [vmem:[%s3 + $0x38] sm:$0xff]
  %v157 = vld [vmem:[%s3 + $0x40] sm:$0xff]
  %v158 = vld [vmem:[%s3 + $0x48] sm:$0xff]
  %v159 = vld [vmem:[%s3 + $0x50] sm:$0xff]
  %v160 = vld [vmem:[%s3 + $0x58] sm:$0xff]
  %v161 = vld [vmem:[%s3 + $0x60] sm:$0xff]
  %v162 = vld [vmem:[%s3 + $0x68] sm:$0xff]
  %v163 = vld [vmem:[%s3 + $0x70] sm:$0xff]
  %v164 = vld [vmem:[%s3 + $0x78] sm:$0xff]
  %165 = vmatprep.subr.mxu0 0.0
  %166 = vmatpush1.msra.mxu0 %v149
  %167 = vmatprep.subr.mxu0 0.0
  %168 = vmatpush1.msra.mxu0 %v150
  %169 = vmatprep.subr.mxu0 0.0
  %170 = vmatpush1.msra.mxu0 %v151
  %171 = vmatprep.subr.mxu0 0.0
  %172 = vmatpush1.msra.mxu0 %v152
  %173 = vmatprep.subr.mxu0 0.0
  %174 = vmatpush1.msra.mxu0 %v153
  %175 = vmatprep.subr.mxu0 0.0
  %176 = vmatpush1.msra.mxu0 %v154
  %177 = vmatprep.subr.mxu0 0.0
  %178 = vmatpush1.msra.mxu0 %v155
  %179 = vmatprep.subr.mxu0 0.0
  %180 = vmatpush1.msra.mxu0 %v156
  %181 = vmatprep.subr.mxu0 0.0
  %182 = vmatpush1.msra.mxu0 %v157
  %183 = vmatprep.subr.mxu0 0.0
  %184 = vmatpush1.msra.mxu0 %v158
  %185 = vmatprep.subr.mxu0 0.0
  %186 = vmatpush1.msra.mxu0 %v159
  %187 = vmatprep.subr.mxu0 0.0
  %188 = vmatpush1.msra.mxu0 %v160
  %189 = vmatprep.subr.mxu0 0.0
  %190 = vmatpush1.msra.mxu0 %v161
  %191 = vmatprep.subr.mxu0 0.0
  %192 = vmatpush1.msra.mxu0 %v162
  %193 = vmatprep.subr.mxu0 0.0
  %194 = vmatpush1.msra.mxu0 %v163
  %195 = vmatprep.subr.mxu0 0.0
  %196 = vmatpush1.msra.mxu0 %v164
  %197 = vmatprep.subr.mxu0 0.0
  %198 = vmatpush1.msra.mxu0 0.0
  %199 = vmatprep.subr.mxu0 0.0
  %200 = vmatpush1.msra.mxu0 0.0
  %201 = vmatprep.subr.mxu0 0.0
  %202 = vmatpush1.msra.mxu0 0.0
  %203 = vmatprep.subr.mxu0 0.0
  %204 = vmatpush1.msra.mxu0 0.0
  %205 = vmatprep.subr.mxu0 0.0
  %206 = vmatpush1.msra.mxu0 0.0
  %207 = vmatprep.subr.mxu0 0.0
  %208 = vmatpush1.msra.mxu0 0.0
  %209 = vmatprep.subr.mxu0 0.0
  %210 = vmatpush1.msra.mxu0 0.0
  %211 = vmatprep.subr.mxu0 0.0
  %212 = vmatpush1.msra.mxu0 0.0
  %213 = vmatprep.subr.mxu0 0.0
  %214 = vmatpush1.msra.mxu0 0.0
  %215 = vmatprep.subr.mxu0 0.0
  %216 = vmatpush1.msra.mxu0 0.0
  %217 = vmatprep.subr.mxu0 0.0
  %218 = vmatpush1.msra.mxu0 0.0
  %219 = vmatprep.subr.mxu0 0.0
  %220 = vmatpush1.msra.mxu0 0.0
  %221 = vmatprep.subr.mxu0 0.0
  %222 = vmatpush1.msra.mxu0 0.0
  %223 = vmatprep.subr.mxu0 0.0
  %224 = vmatpush1.msra.mxu0 0.0
  %225 = vmatprep.subr.mxu0 0.0
  %226 = vmatpush1.msra.mxu0 0.0
  %227 = vmatprep.subr.mxu0 0.0
  %228 = vmatpush1.msra.mxu0 0.0
  %229 = vmatprep.mubr.f32.mxu0 0.0
  %230 = vmatmul.mubr.f32.gmra.mrb[0].mxu0 %v85
  %v231 = vpop.f32.mrb[0].mxu0
  %v232 = vadd.f32 0.0, %v231
  %v233 = vpop.f32.mrb[0].mxu0
  %234 = vmatprep.mubr.f32.mxu0 0.0
  %235 = vmatmul.mubr.f32.gmra.mrb[0].mxu0 %v86
  %v236 = vpop.f32.mrb[0].mxu0
  %v237 = vadd.f32 0.0, %v236
  %v238 = vpop.f32.mrb[0].mxu0
  %239 = vmatprep.mubr.f32.mxu0 0.0
  %240 = vmatmul.mubr.f32.gmra.mrb[0].mxu0 %v87
  %v241 = vpop.f32.mrb[0].mxu0
  %v242 = vadd.f32 0.0, %v241
  %v243 = vpop.f32.mrb[0].mxu0
  %244 = vmatprep.mubr.f32.mxu0 0.0
  %245 = vmatmul.mubr.f32.gmra.mrb[0].mxu0 %v88
  %v246 = vpop.f32.mrb[0].mxu0
  %v247 = vadd.f32 0.0, %v246
  %v248 = vpop.f32.mrb[0].mxu0
  %249 = vmatprep.mubr.f32.mxu0 0.0
  %250 = vmatmul.mubr.f32.gmra.mrb[0].mxu0 %v89
  %v251 = vpop.f32.mrb[0].mxu0
  %v252 = vadd.f32 0.0, %v251
  %v253 = vpop.f32.mrb[0].mxu0
  %254 = vmatprep.mubr.f32.mxu0 0.0
  %255 = vmatmul.mubr.f32.gmra.mrb[0].mxu0 %v90
  %v256 = vpop.f32.mrb[0].mxu0
  %v257 = vadd.f32 0.0, %v256
  %v258 = vpop.f32.mrb[0].mxu0
  %259 = vmatprep.mubr.f32.mxu0 0.0
  %260 = vmatmul.mubr.f32.gmra.mrb[0].mxu0 %v91
  %v261 = vpop.f32.mrb[0].mxu0
  %v262 = vadd.f32 0.0, %v261
  %v263 = vpop.f32.mrb[0].mxu0
  %264 = vmatprep.mubr.f32.mxu0 0.0
  %265 = vmatmul.mubr.f32.gmra.mrb[0].mxu0 %v92
  %v266 = vpop.f32.mrb[0].mxu0
  %v267 = vadd.f32 0.0, %v266
  %v268 = vpop.f32.mrb[0].mxu0
  %269 = vmatprep.mubr.f32.mxu0 0.0
  %270 = vmatmul.mubr.f32.gmra.mrb[0].mxu0 %v93
  %v271 = vpop.f32.mrb[0].mxu0
  %v272 = vadd.f32 0.0, %v271
  %v273 = vpop.f32.mrb[0].mxu0
  %274 = vmatprep.mubr.f32.mxu0 0.0
  %275 = vmatmul.mubr.f32.gmra.mrb[0].mxu0 %v94
  %v276 = vpop.f32.mrb[0].mxu0
  %v277 = vadd.f32 0.0, %v276
  %v278 = vpop.f32.mrb[0].mxu0
  %279 = vmatprep.mubr.f32.mxu0 0.0
  %280 = vmatmul.mubr.f32.gmra.mrb[0].mxu0 %v95
  %v281 = vpop.f32.mrb[0].mxu0
  %v282 = vadd.f32 0.0, %v281
  %v283 = vpop.f32.mrb[0].mxu0
  %284 = vmatprep.mubr.f32.mxu0 0.0
  %285 = vmatmul.mubr.f32.gmra.mrb[0].mxu0 %v96
  %v286 = vpop.f32.mrb[0].mxu0
  %v287 = vadd.f32 0.0, %v286
  %v288 = vpop.f32.mrb[0].mxu0
  %289 = vmatprep.mubr.f32.mxu0 0.0
  %290 = vmatmul.mubr.f32.gmra.mrb[0].mxu0 %v97
  %v291 = vpop.f32.mrb[0].mxu0
  %v292 = vadd.f32 0.0, %v291
  %v293 = vpop.f32.mrb[0].mxu0
  %294 = vmatprep.mubr.f32.mxu0 0.0
  %295 = vmatmul.mubr.f32.gmra.mrb[0].mxu0 %v98
  %v296 = vpop.f32.mrb[0].mxu0
  %v297 = vadd.f32 0.0, %v296
  %v298 = vpop.f32.mrb[0].mxu0
  %299 = vmatprep.mubr.f32.mxu0 0.0
  %300 = vmatmul.mubr.f32.gmra.mrb[0].mxu0 %v99
  %v301 = vpop.f32.mrb[0].mxu0
  %v302 = vadd.f32 0.0, %v301
  %v303 = vpop.f32.mrb[0].mxu0
  %304 = vmatprep.mubr.f32.mxu0 0.0
  %305 = vmatmul.mubr.f32.gmra.mrb[0].mxu0 %v100
  %v306 = vpop.f32.mrb[0].mxu0
  %v307 = vadd.f32 0.0, %v306
  %v308 = vpop.f32.mrb[0].mxu0
  %309 = vmatprep.mubr.f32.mxu0 0.0
  %310 = vmatmul.mubr.f32.gmra.mrb[0].mxu0 %v101
  %v311 = vpop.f32.mrb[0].mxu0
  %v312 = vadd.f32 0.0, %v311
  %v313 = vpop.f32.mrb[0].mxu0
  %314 = vmatprep.mubr.f32.mxu0 0.0
  %315 = vmatmul.mubr.f32.gmra.mrb[0].mxu0 %v102
  %v316 = vpop.f32.mrb[0].mxu0
  %v317 = vadd.f32 0.0, %v316
  %v318 = vpop.f32.mrb[0].mxu0
  %319 = vmatprep.mubr.f32.mxu0 0.0
  %320 = vmatmul.mubr.f32.gmra.mrb[0].mxu0 %v103
  %v321 = vpop.f32.mrb[0].mxu0
  %v322 = vadd.f32 0.0, %v321
  %v323 = vpop.f32.mrb[0].mxu0
  %324 = vmatprep.mubr.f32.mxu0 0.0
  %325 = vmatmul.mubr.f32.gmra.mrb[0].mxu0 %v104
  %v326 = vpop.f32.mrb[0].mxu0
  %v327 = vadd.f32 0.0, %v326
  %v328 = vpop.f32.mrb[0].mxu0
  %329 = vmatprep.mubr.f32.mxu0 0.0
  %330 = vmatmul.mubr.f32.gmra.mrb[0].mxu0 %v105
  %v331 = vpop.f32.mrb[0].mxu0
  %v332 = vadd.f32 0.0, %v331
  %v333 = vpop.f32.mrb[0].mxu0
  %334 = vmatprep.mubr.f32.mxu0 0.0
  %335 = vmatmul.mubr.f32.gmra.mrb[0].mxu0 %v106
  %v336 = vpop.f32.mrb[0].mxu0
  %v337 = vadd.f32 0.0, %v336
  %v338 = vpop.f32.mrb[0].mxu0
  %339 = vmatprep.mubr.f32.mxu0 0.0
  %340 = vmatmul.mubr.f32.gmra.mrb[0].mxu0 %v107
  %v341 = vpop.f32.mrb[0].mxu0
  %v342 = vadd.f32 0.0, %v341
  %v343 = vpop.f32.mrb[0].mxu0
  %344 = vmatprep.mubr.f32.mxu0 0.0
  %345 = vmatmul.mubr.f32.gmra.mrb[0].mxu0 %v108
  %v346 = vpop.f32.mrb[0].mxu0
  %v347 = vadd.f32 0.0, %v346
  %v348 = vpop.f32.mrb[0].mxu0
  %349 = vmatprep.mubr.f32.mxu0 0.0
  %350 = vmatmul.mubr.f32.gmra.mrb[0].mxu0 %v109
  %v351 = vpop.f32.mrb[0].mxu0
  %v352 = vadd.f32 0.0, %v351
  %v353 = vpop.f32.mrb[0].mxu0
  %354 = vmatprep.mubr.f32.mxu0 0.0
  %355 = vmatmul.mubr.f32.gmra.mrb[0].mxu0 %v110
  %v356 = vpop.f32.mrb[0].mxu0
  %v357 = vadd.f32 0.0, %v356
  %v358 = vpop.f32.mrb[0].mxu0
  %359 = vmatprep.mubr.f32.mxu0 0.0
  %360 = vmatmul.mubr.f32.gmra.mrb[0].mxu0 %v111
  %v361 = vpop.f32.mrb[0].mxu0
  %v362 = vadd.f32 0.0, %v361
  %v363 = vpop.f32.mrb[0].mxu0
  %364 = vmatprep.mubr.f32.mxu0 0.0
  %365 = vmatmul.mubr.f32.gmra.mrb[0].mxu0 %v112
  %v366 = vpop.f32.mrb[0].mxu0
  %v367 = vadd.f32 0.0, %v366
  %v368 = vpop.f32.mrb[0].mxu0
  %369 = vmatprep.mubr.f32.mxu0 0.0
  %370 = vmatmul.mubr.f32.gmra.mrb[0].mxu0 %v113
  %v371 = vpop.f32.mrb[0].mxu0
  %v372 = vadd.f32 0.0, %v371
  %v373 = vpop.f32.mrb[0].mxu0
  %374 = vmatprep.mubr.f32.mxu0 0.0
  %375 = vmatmul.mubr.f32.gmra.mrb[0].mxu0 %v114
  %v376 = vpop.f32.mrb[0].mxu0
  %v377 = vadd.f32 0.0, %v376
  %v378 = vpop.f32.mrb[0].mxu0
  %379 = vmatprep.mubr.f32.mxu0 0.0
  %380 = vmatmul.mubr.f32.gmra.mrb[0].mxu0 %v115
  %v381 = vpop.f32.mrb[0].mxu0
  %v382 = vadd.f32 0.0, %v381
  %v383 = vpop.f32.mrb[0].mxu0
  %384 = vmatprep.mubr.f32.mxu0 0.0
  %385 = vmatmul.mubr.f32.gmra.mrb[0].mxu0 %v116
  %v386 = vpop.f32.mrb[0].mxu0
  %v387 = vadd.f32 0.0, %v386
  %v388 = vpop.f32.mrb[0].mxu0
  %389 = vmatprep.mubr.f32.mxu0 0.0
  %390 = vmatmul.mubr.f32.gmra.mrb[0].mxu0 %v117
  %v391 = vpop.f32.mrb[0].mxu0
  %v392 = vadd.f32 0.0, %v391
  %v393 = vpop.f32.mrb[0].mxu0
  %394 = vmatprep.mubr.f32.mxu0 0.0
  %395 = vmatmul.mubr.f32.gmra.mrb[0].mxu0 %v118
  %v396 = vpop.f32.mrb[0].mxu0
  %v397 = vadd.f32 0.0, %v396
  %v398 = vpop.f32.mrb[0].mxu0
  %399 = vmatprep.mubr.f32.mxu0 0.0
  %400 = vmatmul.mubr.f32.gmra.mrb[0].mxu0 %v119
  %v401 = vpop.f32.mrb[0].mxu0
  %v402 = vadd.f32 0.0, %v401
  %v403 = vpop.f32.mrb[0].mxu0
  %404 = vmatprep.mubr.f32.mxu0 0.0
  %405 = vmatmul.mubr.f32.gmra.mrb[0].mxu0 %v120
  %v406 = vpop.f32.mrb[0].mxu0
  %v407 = vadd.f32 0.0, %v406
  %v408 = vpop.f32.mrb[0].mxu0
  %409 = vmatprep.mubr.f32.mxu0 0.0
  %410 = vmatmul.mubr.f32.gmra.mrb[0].mxu0 %v121
  %v411 = vpop.f32.mrb[0].mxu0
  %v412 = vadd.f32 0.0, %v411
  %v413 = vpop.f32.mrb[0].mxu0
  %414 = vmatprep.mubr.f32.mxu0 0.0
  %415 = vmatmul.mubr.f32.gmra.mrb[0].mxu0 %v122
  %v416 = vpop.f32.mrb[0].mxu0
  %v417 = vadd.f32 0.0, %v416
  %v418 = vpop.f32.mrb[0].mxu0
  %419 = vmatprep.mubr.f32.mxu0 0.0
  %420 = vmatmul.mubr.f32.gmra.mrb[0].mxu0 %v123
  %v421 = vpop.f32.mrb[0].mxu0
  %v422 = vadd.f32 0.0, %v421
  %v423 = vpop.f32.mrb[0].mxu0
  %424 = vmatprep.mubr.f32.mxu0 0.0
  %425 = vmatmul.mubr.f32.gmra.mrb[0].mxu0 %v124
  %v426 = vpop.f32.mrb[0].mxu0
  %v427 = vadd.f32 0.0, %v426
  %v428 = vpop.f32.mrb[0].mxu0
  %429 = vmatprep.mubr.f32.mxu0 0.0
  %430 = vmatmul.mubr.f32.gmra.mrb[0].mxu0 %v125
  %v431 = vpop.f32.mrb[0].mxu0
  %v432 = vadd.f32 0.0, %v431
  %v433 = vpop.f32.mrb[0].mxu0
  %434 = vmatprep.mubr.f32.mxu0 0.0
  %435 = vmatmul.mubr.f32.gmra.mrb[0].mxu0 %v126
  %v436 = vpop.f32.mrb[0].mxu0
  %v437 = vadd.f32 0.0, %v436
  %v438 = vpop.f32.mrb[0].mxu0
  %439 = vmatprep.mubr.f32.mxu0 0.0
  %440 = vmatmul.mubr.f32.gmra.mrb[0].mxu0 %v127
  %v441 = vpop.f32.mrb[0].mxu0
  %v442 = vadd.f32 0.0, %v441
  %v443 = vpop.f32.mrb[0].mxu0
  %444 = vmatprep.mubr.f32.mxu0 0.0
  %445 = vmatmul.mubr.f32.gmra.mrb[0].mxu0 %v128
  %v446 = vpop.f32.mrb[0].mxu0
  %v447 = vadd.f32 0.0, %v446
  %v448 = vpop.f32.mrb[0].mxu0
  %449 = vmatprep.mubr.f32.mxu0 0.0
  %450 = vmatmul.mubr.f32.gmra.mrb[0].mxu0 %v129
  %v451 = vpop.f32.mrb[0].mxu0
  %v452 = vadd.f32 0.0, %v451
  %v453 = vpop.f32.mrb[0].mxu0
  %454 = vmatprep.mubr.f32.mxu0 0.0
  %455 = vmatmul.mubr.f32.gmra.mrb[0].mxu0 %v130
  %v456 = vpop.f32.mrb[0].mxu0
  %v457 = vadd.f32 0.0, %v456
  %v458 = vpop.f32.mrb[0].mxu0
  %459 = vmatprep.mubr.f32.mxu0 0.0
  %460 = vmatmul.mubr.f32.gmra.mrb[0].mxu0 %v131
  %v461 = vpop.f32.mrb[0].mxu0
  %v462 = vadd.f32 0.0, %v461
  %v463 = vpop.f32.mrb[0].mxu0
  %464 = vmatprep.mubr.f32.mxu0 0.0
  %465 = vmatmul.mubr.f32.gmra.mrb[0].mxu0 %v132
  %v466 = vpop.f32.mrb[0].mxu0
  %v467 = vadd.f32 0.0, %v466
  %v468 = vpop.f32.mrb[0].mxu0
  %469 = vmatprep.mubr.f32.mxu0 0.0
  %470 = vmatmul.mubr.f32.gmra.mrb[0].mxu0 %v133
  %v471 = vpop.f32.mrb[0].mxu0
  %v472 = vadd.f32 0.0, %v471
  %v473 = vpop.f32.mrb[0].mxu0
  %474 = vmatprep.mubr.f32.mxu0 0.0
  %475 = vmatmul.mubr.f32.gmra.mrb[0].mxu0 %v134
  %v476 = vpop.f32.mrb[0].mxu0
  %v477 = vadd.f32 0.0, %v476
  %v478 = vpop.f32.mrb[0].mxu0
  %479 = vmatprep.mubr.f32.mxu0 0.0
  %480 = vmatmul.mubr.f32.gmra.mrb[0].mxu0 %v135
  %v481 = vpop.f32.mrb[0].mxu0
  %v482 = vadd.f32 0.0, %v481
  %v483 = vpop.f32.mrb[0].mxu0
  %484 = vmatprep.mubr.f32.mxu0 0.0
  %485 = vmatmul.mubr.f32.gmra.mrb[0].mxu0 %v136
  %v486 = vpop.f32.mrb[0].mxu0
  %v487 = vadd.f32 0.0, %v486
  %v488 = vpop.f32.mrb[0].mxu0
  %489 = vmatprep.mubr.f32.mxu0 0.0
  %490 = vmatmul.mubr.f32.gmra.mrb[0].mxu0 %v137
  %v491 = vpop.f32.mrb[0].mxu0
  %v492 = vadd.f32 0.0, %v491
  %v493 = vpop.f32.mrb[0].mxu0
  %494 = vmatprep.mubr.f32.mxu0 0.0
  %495 = vmatmul.mubr.f32.gmra.mrb[0].mxu0 %v138
  %v496 = vpop.f32.mrb[0].mxu0
  %v497 = vadd.f32 0.0, %v496
  %v498 = vpop.f32.mrb[0].mxu0
  %499 = vmatprep.mubr.f32.mxu0 0.0
  %500 = vmatmul.mubr.f32.gmra.mrb[0].mxu0 %v139
  %v501 = vpop.f32.mrb[0].mxu0
  %v502 = vadd.f32 0.0, %v501
  %v503 = vpop.f32.mrb[0].mxu0
  %504 = vmatprep.mubr.f32.mxu0 0.0
  %505 = vmatmul.mubr.f32.gmra.mrb[0].mxu0 %v140
  %v506 = vpop.f32.mrb[0].mxu0
  %v507 = vadd.f32 0.0, %v506
  %v508 = vpop.f32.mrb[0].mxu0
  %509 = vmatprep.mubr.f32.mxu0 0.0
  %510 = vmatmul.mubr.f32.gmra.mrb[0].mxu0 %v141
  %v511 = vpop.f32.mrb[0].mxu0
  %v512 = vadd.f32 0.0, %v511
  %v513 = vpop.f32.mrb[0].mxu0
  %514 = vmatprep.mubr.f32.mxu0 0.0
  %515 = vmatmul.mubr.f32.gmra.mrb[0].mxu0 %v142
  %v516 = vpop.f32.mrb[0].mxu0
  %v517 = vadd.f32 0.0, %v516
  %v518 = vpop.f32.mrb[0].mxu0
  %519 = vmatprep.mubr.f32.mxu0 0.0
  %520 = vmatmul.mubr.f32.gmra.mrb[0].mxu0 %v143
  %v521 = vpop.f32.mrb[0].mxu0
  %v522 = vadd.f32 0.0, %v521
  %v523 = vpop.f32.mrb[0].mxu0
  %524 = vmatprep.mubr.f32.mxu0 0.0
  %525 = vmatmul.mubr.f32.gmra.mrb[0].mxu0 %v144
  %v526 = vpop.f32.mrb[0].mxu0
  %v527 = vadd.f32 0.0, %v526
  %v528 = vpop.f32.mrb[0].mxu0
  %529 = vmatprep.mubr.f32.mxu0 0.0
  %530 = vmatmul.mubr.f32.gmra.mrb[0].mxu0 %v145
  %v531 = vpop.f32.mrb[0].mxu0
  %v532 = vadd.f32 0.0, %v531
  %v533 = vpop.f32.mrb[0].mxu0
  %534 = vmatprep.mubr.f32.mxu0 0.0
  %535 = vmatmul.mubr.f32.gmra.mrb[0].mxu0 %v146
  %v536 = vpop.f32.mrb[0].mxu0
  %v537 = vadd.f32 0.0, %v536
  %v538 = vpop.f32.mrb[0].mxu0
  %539 = vmatprep.mubr.f32.mxu0 0.0
  %540 = vmatmul.mubr.f32.gmra.mrb[0].mxu0 %v147
  %v541 = vpop.f32.mrb[0].mxu0
  %v542 = vadd.f32 0.0, %v541
  %v543 = vpop.f32.mrb[0].mxu0
  %544 = vmatprep.mubr.f32.mxu0 0.0
  %545 = vmatmul.mubr.f32.gmra.mrb[0].mxu0 %v148
  %v546 = vpop.f32.mrb[0].mxu0
  %v547 = vadd.f32 0.0, %v546
  %v548 = vpop.f32.mrb[0].mxu0
  %549 = vdwg.mxu0
  %vm550 = vcmask 64512
  %v552 = vsel %vm550, %v20, 0
  %v555 = vsel %vm550, %v21, 0
  %v558 = vsel %vm550, %v22, 0
  %v561 = vsel %vm550, %v23, 0
  %v564 = vsel %vm550, %v24, 0
  %v567 = vsel %vm550, %v25, 0
  %v570 = vsel %vm550, %v26, 0
  %v573 = vsel %vm550, %v27, 0
  %v576 = vsel %vm550, %v28, 0
  %v579 = vsel %vm550, %v29, 0
  %v582 = vsel %vm550, %v30, 0
  %v585 = vsel %vm550, %v31, 0
  %v588 = vsel %vm550, %v32, 0
  %v591 = vsel %vm550, %v33, 0
  %v594 = vsel %vm550, %v34, 0
  %v597 = vsel %vm550, %v35, 0
  %v600 = vsel %vm550, %v36, 0
  %v603 = vsel %vm550, %v37, 0
  %v606 = vsel %vm550, %v38, 0
  %v609 = vsel %vm550, %v39, 0
  %v612 = vsel %vm550, %v40, 0
  %v615 = vsel %vm550, %v41, 0
  %v618 = vsel %vm550, %v42, 0
  %v621 = vsel %vm550, %v43, 0
  %v624 = vsel %vm550, %v44, 0
  %v627 = vsel %vm550, %v45, 0
  %v630 = vsel %vm550, %v46, 0
  %v633 = vsel %vm550, %v47, 0
  %v636 = vsel %vm550, %v48, 0
  %v639 = vsel %vm550, %v49, 0
  %v642 = vsel %vm550, %v50, 0
  %v645 = vsel %vm550, %v51, 0
  %v648 = vsel %vm550, %v52, 0
  %v651 = vsel %vm550, %v53, 0
  %v654 = vsel %vm550, %v54, 0
  %v657 = vsel %vm550, %v55, 0
  %v660 = vsel %vm550, %v56, 0
  %v663 = vsel %vm550, %v57, 0
  %v666 = vsel %vm550, %v58, 0
  %v669 = vsel %vm550, %v59, 0
  %v672 = vsel %vm550, %v60, 0
  %v675 = vsel %vm550, %v61, 0
  %v678 = vsel %vm550, %v62, 0
  %v681 = vsel %vm550, %v63, 0
  %v684 = vsel %vm550, %v64, 0
  %v687 = vsel %vm550, %v65, 0
  %v690 = vsel %vm550, %v66, 0
  %v693 = vsel %vm550, %v67, 0
  %v696 = vsel %vm550, %v68, 0
  %v699 = vsel %vm550, %v69, 0
  %v702 = vsel %vm550, %v70, 0
  %v705 = vsel %vm550, %v71, 0
  %v708 = vsel %vm550, %v72, 0
  %v711 = vsel %vm550, %v73, 0
  %v714 = vsel %vm550, %v74, 0
  %v717 = vsel %vm550, %v75, 0
  %v720 = vsel %vm550, %v76, 0
  %v723 = vsel %vm550, %v77, 0
  %v726 = vsel %vm550, %v78, 0
  %v729 = vsel %vm550, %v79, 0
  %v732 = vsel %vm550, %v80, 0
  %v735 = vsel %vm550, %v81, 0
  %v738 = vsel %vm550, %v82, 0
  %v741 = vsel %vm550, %v83, 0
  %743 = vmatprep.subr.mxu0 0.0
  %744 = vmatpush1.msra.mxu0 %v84
  %745 = vmatprep.subr.mxu0 0.0
  %746 = vmatpush1.msra.mxu0 0.0
  %747 = vmatprep.subr.mxu0 0.0
  %748 = vmatpush1.msra.mxu0 0.0
  %749 = vmatprep.subr.mxu0 0.0
  %750 = vmatpush1.msra.mxu0 0.0
  %751 = vmatprep.subr.mxu0 0.0
  %752 = vmatpush1.msra.mxu0 0.0
  %753 = vmatprep.subr.mxu0 0.0
  %754 = vmatpush1.msra.mxu0 0.0
  %755 = vmatprep.subr.mxu0 0.0
  %756 = vmatpush1.msra.mxu0 0.0
  %757 = vmatprep.subr.mxu0 0.0
  %758 = vmatpush1.msra.mxu0 0.0
  %759 = vmatprep.subr.mxu0 0.0
  %760 = vmatpush1.msra.mxu0 0.0
  %761 = vmatprep.subr.mxu0 0.0
  %762 = vmatpush1.msra.mxu0 0.0
  %763 = vmatprep.subr.mxu0 0.0
  %764 = vmatpush1.msra.mxu0 0.0
  %765 = vmatprep.subr.mxu0 0.0
  %766 = vmatpush1.msra.mxu0 0.0
  %767 = vmatprep.subr.mxu0 0.0
  %768 = vmatpush1.msra.mxu0 0.0
  %769 = vmatprep.subr.mxu0 0.0
  %770 = vmatpush1.msra.mxu0 0.0
  %771 = vmatprep.subr.mxu0 0.0
  %772 = vmatpush1.msra.mxu0 0.0
  %773 = vmatprep.subr.mxu0 0.0
  %774 = vmatpush1.msra.mxu0 0.0
  %775 = vmatprep.subr.mxu0 0.0
  %776 = vmatpush1.msra.mxu0 0.0
  %777 = vmatprep.subr.mxu0 0.0
  %778 = vmatpush1.msra.mxu0 0.0
  %779 = vmatprep.subr.mxu0 0.0
  %780 = vmatpush1.msra.mxu0 0.0
  %781 = vmatprep.subr.mxu0 0.0
  %782 = vmatpush1.msra.mxu0 0.0
  %783 = vmatprep.subr.mxu0 0.0
  %784 = vmatpush1.msra.mxu0 0.0
  %785 = vmatprep.subr.mxu0 0.0
  %786 = vmatpush1.msra.mxu0 0.0
  %787 = vmatprep.subr.mxu0 0.0
  %788 = vmatpush1.msra.mxu0 0.0
  %789 = vmatprep.subr.mxu0 0.0
  %790 = vmatpush1.msra.mxu0 0.0
  %791 = vmatprep.subr.mxu0 0.0
  %792 = vmatpush1.msra.mxu0 0.0
  %793 = vmatprep.subr.mxu0 0.0
  %794 = vmatpush1.msra.mxu0 0.0
  %795 = vmatprep.subr.mxu0 0.0
  %796 = vmatpush1.msra.mxu0 0.0
  %797 = vmatprep.subr.mxu0 0.0
  %798 = vmatpush1.msra.mxu0 0.0
  %799 = vmatprep.subr.mxu0 0.0
  %800 = vmatpush1.msra.mxu0 0.0
  %801 = vmatprep.subr.mxu0 0.0
  %802 = vmatpush1.msra.mxu0 0.0
  %803 = vmatprep.subr.mxu0 0.0
  %804 = vmatpush1.msra.mxu0 0.0
  %805 = vmatprep.subr.mxu0 0.0
  %806 = vmatpush1.msra.mxu0 0.0
  %807 = vmatprep.mubr.f32.mxu0 0.0
  %808 = vmatmul.mubr.f32.gmra.mrb[0].mxu0 %v552
  %v809 = vpop.f32.mrb[0].mxu0
  %v810 = vadd.f32 %v232, %v809
  %v811 = vpop.f32.mrb[0].mxu0
  %812 = vmatprep.mubr.f32.mxu0 0.0
  %813 = vmatmul.mubr.f32.gmra.mrb[0].mxu0 %v555
  %v814 = vpop.f32.mrb[0].mxu0
  %v815 = vadd.f32 %v237, %v814
  %v816 = vpop.f32.mrb[0].mxu0
  %817 = vmatprep.mubr.f32.mxu0 0.0
  %818 = vmatmul.mubr.f32.gmra.mrb[0].mxu0 %v558
  %v819 = vpop.f32.mrb[0].mxu0
  %v820 = vadd.f32 %v242, %v819
  %v821 = vpop.f32.mrb[0].mxu0
  %822 = vmatprep.mubr.f32.mxu0 0.0
  %823 = vmatmul.mubr.f32.gmra.mrb[0].mxu0 %v561
  %v824 = vpop.f32.mrb[0].mxu0
  %v825 = vadd.f32 %v247, %v824
  %v826 = vpop.f32.mrb[0].mxu0
  %827 = vmatprep.mubr.f32.mxu0 0.0
  %828 = vmatmul.mubr.f32.gmra.mrb[0].mxu0 %v564
  %v829 = vpop.f32.mrb[0].mxu0
  %v830 = vadd.f32 %v252, %v829
  %v831 = vpop.f32.mrb[0].mxu0
  %832 = vmatprep.mubr.f32.mxu0 0.0
  %833 = vmatmul.mubr.f32.gmra.mrb[0].mxu0 %v567
  %v834 = vpop.f32.mrb[0].mxu0
  %v835 = vadd.f32 %v257, %v834
  %v836 = vpop.f32.mrb[0].mxu0
  %837 = vmatprep.mubr.f32.mxu0 0.0
  %838 = vmatmul.mubr.f32.gmra.mrb[0].mxu0 %v570
  %v839 = vpop.f32.mrb[0].mxu0
  %v840 = vadd.f32 %v262, %v839
  %v841 = vpop.f32.mrb[0].mxu0
  %842 = vmatprep.mubr.f32.mxu0 0.0
  %843 = vmatmul.mubr.f32.gmra.mrb[0].mxu0 %v573
  %v844 = vpop.f32.mrb[0].mxu0
  %v845 = vadd.f32 %v267, %v844
  %v846 = vpop.f32.mrb[0].mxu0
  %847 = vmatprep.mubr.f32.mxu0 0.0
  %848 = vmatmul.mubr.f32.gmra.mrb[0].mxu0 %v576
  %v849 = vpop.f32.mrb[0].mxu0
  %v850 = vadd.f32 %v272, %v849
  %v851 = vpop.f32.mrb[0].mxu0
  %852 = vmatprep.mubr.f32.mxu0 0.0
  %853 = vmatmul.mubr.f32.gmra.mrb[0].mxu0 %v579
  %v854 = vpop.f32.mrb[0].mxu0
  %v855 = vadd.f32 %v277, %v854
  %v856 = vpop.f32.mrb[0].mxu0
  %857 = vmatprep.mubr.f32.mxu0 0.0
  %858 = vmatmul.mubr.f32.gmra.mrb[0].mxu0 %v582
  %v859 = vpop.f32.mrb[0].mxu0
  %v860 = vadd.f32 %v282, %v859
  %v861 = vpop.f32.mrb[0].mxu0
  %862 = vmatprep.mubr.f32.mxu0 0.0
  %863 = vmatmul.mubr.f32.gmra.mrb[0].mxu0 %v585
  %v864 = vpop.f32.mrb[0].mxu0
  %v865 = vadd.f32 %v287, %v864
  %v866 = vpop.f32.mrb[0].mxu0
  %867 = vmatprep.mubr.f32.mxu0 0.0
  %868 = vmatmul.mubr.f32.gmra.mrb[0].mxu0 %v588
  %v869 = vpop.f32.mrb[0].mxu0
  %v870 = vadd.f32 %v292, %v869
  %v871 = vpop.f32.mrb[0].mxu0
  %872 = vmatprep.mubr.f32.mxu0 0.0
  %873 = vmatmul.mubr.f32.gmra.mrb[0].mxu0 %v591
  %v874 = vpop.f32.mrb[0].mxu0
  %v875 = vadd.f32 %v297, %v874
  %v876 = vpop.f32.mrb[0].mxu0
  %877 = vmatprep.mubr.f32.mxu0 0.0
  %878 = vmatmul.mubr.f32.gmra.mrb[0].mxu0 %v594
  %v879 = vpop.f32.mrb[0].mxu0
  %v880 = vadd.f32 %v302, %v879
  %v881 = vpop.f32.mrb[0].mxu0
  %882 = vmatprep.mubr.f32.mxu0 0.0
  %883 = vmatmul.mubr.f32.gmra.mrb[0].mxu0 %v597
  %v884 = vpop.f32.mrb[0].mxu0
  %v885 = vadd.f32 %v307, %v884
  %v886 = vpop.f32.mrb[0].mxu0
  %887 = vmatprep.mubr.f32.mxu0 0.0
  %888 = vmatmul.mubr.f32.gmra.mrb[0].mxu0 %v600
  %v889 = vpop.f32.mrb[0].mxu0
  %v890 = vadd.f32 %v312, %v889
  %v891 = vpop.f32.mrb[0].mxu0
  %892 = vmatprep.mubr.f32.mxu0 0.0
  %893 = vmatmul.mubr.f32.gmra.mrb[0].mxu0 %v603
  %v894 = vpop.f32.mrb[0].mxu0
  %v895 = vadd.f32 %v317, %v894
  %v896 = vpop.f32.mrb[0].mxu0
  %897 = vmatprep.mubr.f32.mxu0 0.0
  %898 = vmatmul.mubr.f32.gmra.mrb[0].mxu0 %v606
  %v899 = vpop.f32.mrb[0].mxu0
  %v900 = vadd.f32 %v322, %v899
  %v901 = vpop.f32.mrb[0].mxu0
  %902 = vmatprep.mubr.f32.mxu0 0.0
  %903 = vmatmul.mubr.f32.gmra.mrb[0].mxu0 %v609
  %v904 = vpop.f32.mrb[0].mxu0
  %v905 = vadd.f32 %v327, %v904
  %v906 = vpop.f32.mrb[0].mxu0
  %907 = vmatprep.mubr.f32.mxu0 0.0
  %908 = vmatmul.mubr.f32.gmra.mrb[0].mxu0 %v612
  %v909 = vpop.f32.mrb[0].mxu0
  %v910 = vadd.f32 %v332, %v909
  %v911 = vpop.f32.mrb[0].mxu0
  %912 = vmatprep.mubr.f32.mxu0 0.0
  %913 = vmatmul.mubr.f32.gmra.mrb[0].mxu0 %v615
  %v914 = vpop.f32.mrb[0].mxu0
  %v915 = vadd.f32 %v337, %v914
  %v916 = vpop.f32.mrb[0].mxu0
  %917 = vmatprep.mubr.f32.mxu0 0.0
  %918 = vmatmul.mubr.f32.gmra.mrb[0].mxu0 %v618
  %v919 = vpop.f32.mrb[0].mxu0
  %v920 = vadd.f32 %v342, %v919
  %v921 = vpop.f32.mrb[0].mxu0
  %922 = vmatprep.mubr.f32.mxu0 0.0
  %923 = vmatmul.mubr.f32.gmra.mrb[0].mxu0 %v621
  %v924 = vpop.f32.mrb[0].mxu0
  %v925 = vadd.f32 %v347, %v924
  %v926 = vpop.f32.mrb[0].mxu0
  %927 = vmatprep.mubr.f32.mxu0 0.0
  %928 = vmatmul.mubr.f32.gmra.mrb[0].mxu0 %v624
  %v929 = vpop.f32.mrb[0].mxu0
  %v930 = vadd.f32 %v352, %v929
  %v931 = vpop.f32.mrb[0].mxu0
  %932 = vmatprep.mubr.f32.mxu0 0.0
  %933 = vmatmul.mubr.f32.gmra.mrb[0].mxu0 %v627
  %v934 = vpop.f32.mrb[0].mxu0
  %v935 = vadd.f32 %v357, %v934
  %v936 = vpop.f32.mrb[0].mxu0
  %937 = vmatprep.mubr.f32.mxu0 0.0
  %938 = vmatmul.mubr.f32.gmra.mrb[0].mxu0 %v630
  %v939 = vpop.f32.mrb[0].mxu0
  %v940 = vadd.f32 %v362, %v939
  %v941 = vpop.f32.mrb[0].mxu0
  %942 = vmatprep.mubr.f32.mxu0 0.0
  %943 = vmatmul.mubr.f32.gmra.mrb[0].mxu0 %v633
  %v944 = vpop.f32.mrb[0].mxu0
  %v945 = vadd.f32 %v367, %v944
  %v946 = vpop.f32.mrb[0].mxu0
  %947 = vmatprep.mubr.f32.mxu0 0.0
  %948 = vmatmul.mubr.f32.gmra.mrb[0].mxu0 %v636
  %v949 = vpop.f32.mrb[0].mxu0
  %v950 = vadd.f32 %v372, %v949
  %v951 = vpop.f32.mrb[0].mxu0
  %952 = vmatprep.mubr.f32.mxu0 0.0
  %953 = vmatmul.mubr.f32.gmra.mrb[0].mxu0 %v639
  %v954 = vpop.f32.mrb[0].mxu0
  %v955 = vadd.f32 %v377, %v954
  %v956 = vpop.f32.mrb[0].mxu0
  %957 = vmatprep.mubr.f32.mxu0 0.0
  %958 = vmatmul.mubr.f32.gmra.mrb[0].mxu0 %v642
  %v959 = vpop.f32.mrb[0].mxu0
  %v960 = vadd.f32 %v382, %v959
  %v961 = vpop.f32.mrb[0].mxu0
  %962 = vmatprep.mubr.f32.mxu0 0.0
  %963 = vmatmul.mubr.f32.gmra.mrb[0].mxu0 %v645
  %v964 = vpop.f32.mrb[0].mxu0
  %v965 = vadd.f32 %v387, %v964
  %v966 = vpop.f32.mrb[0].mxu0
  %967 = vmatprep.mubr.f32.mxu0 0.0
  %968 = vmatmul.mubr.f32.gmra.mrb[0].mxu0 %v648
  %v969 = vpop.f32.mrb[0].mxu0
  %v970 = vadd.f32 %v392, %v969
  %v971 = vpop.f32.mrb[0].mxu0
  %972 = vmatprep.mubr.f32.mxu0 0.0
  %973 = vmatmul.mubr.f32.gmra.mrb[0].mxu0 %v651
  %v974 = vpop.f32.mrb[0].mxu0
  %v975 = vadd.f32 %v397, %v974
  %v976 = vpop.f32.mrb[0].mxu0
  %977 = vmatprep.mubr.f32.mxu0 0.0
  %978 = vmatmul.mubr.f32.gmra.mrb[0].mxu0 %v654
  %v979 = vpop.f32.mrb[0].mxu0
  %v980 = vadd.f32 %v402, %v979
  %v981 = vpop.f32.mrb[0].mxu0
  %982 = vmatprep.mubr.f32.mxu0 0.0
  %983 = vmatmul.mubr.f32.gmra.mrb[0].mxu0 %v657
  %v984 = vpop.f32.mrb[0].mxu0
  %v985 = vadd.f32 %v407, %v984
  %v986 = vpop.f32.mrb[0].mxu0
  %987 = vmatprep.mubr.f32.mxu0 0.0
  %988 = vmatmul.mubr.f32.gmra.mrb[0].mxu0 %v660
  %v989 = vpop.f32.mrb[0].mxu0
  %v990 = vadd.f32 %v412, %v989
  %v991 = vpop.f32.mrb[0].mxu0
  %992 = vmatprep.mubr.f32.mxu0 0.0
  %993 = vmatmul.mubr.f32.gmra.mrb[0].mxu0 %v663
  %v994 = vpop.f32.mrb[0].mxu0
  %v995 = vadd.f32 %v417, %v994
  %v996 = vpop.f32.mrb[0].mxu0
  %997 = vmatprep.mubr.f32.mxu0 0.0
  %998 = vmatmul.mubr.f32.gmra.mrb[0].mxu0 %v666
  %v999 = vpop.f32.mrb[0].mxu0
  %v1000 = vadd.f32 %v422, %v999
  %v1001 = vpop.f32.mrb[0].mxu0
  %1002 = vmatprep.mubr.f32.mxu0 0.0
  %1003 = vmatmul.mubr.f32.gmra.mrb[0].mxu0 %v669
  %v1004 = vpop.f32.mrb[0].mxu0
  %v1005 = vadd.f32 %v427, %v1004
  %v1006 = vpop.f32.mrb[0].mxu0
  %1007 = vmatprep.mubr.f32.mxu0 0.0
  %1008 = vmatmul.mubr.f32.gmra.mrb[0].mxu0 %v672
  %v1009 = vpop.f32.mrb[0].mxu0
  %v1010 = vadd.f32 %v432, %v1009
  %v1011 = vpop.f32.mrb[0].mxu0
  %1012 = vmatprep.mubr.f32.mxu0 0.0
  %1013 = vmatmul.mubr.f32.gmra.mrb[0].mxu0 %v675
  %v1014 = vpop.f32.mrb[0].mxu0
  %v1015 = vadd.f32 %v437, %v1014
  %v1016 = vpop.f32.mrb[0].mxu0
  %1017 = vmatprep.mubr.f32.mxu0 0.0
  %1018 = vmatmul.mubr.f32.gmra.mrb[0].mxu0 %v678
  %v1019 = vpop.f32.mrb[0].mxu0
  %v1020 = vadd.f32 %v442, %v1019
  %v1021 = vpop.f32.mrb[0].mxu0
  %1022 = vmatprep.mubr.f32.mxu0 0.0
  %1023 = vmatmul.mubr.f32.gmra.mrb[0].mxu0 %v681
  %v1024 = vpop.f32.mrb[0].mxu0
  %v1025 = vadd.f32 %v447, %v1024
  %v1026 = vpop.f32.mrb[0].mxu0
  %1027 = vmatprep.mubr.f32.mxu0 0.0
  %1028 = vmatmul.mubr.f32.gmra.mrb[0].mxu0 %v684
  %v1029 = vpop.f32.mrb[0].mxu0
  %v1030 = vadd.f32 %v452, %v1029
  %v1031 = vpop.f32.mrb[0].mxu0
  %1032 = vmatprep.mubr.f32.mxu0 0.0
  %1033 = vmatmul.mubr.f32.gmra.mrb[0].mxu0 %v687
  %v1034 = vpop.f32.mrb[0].mxu0
  %v1035 = vadd.f32 %v457, %v1034
  %v1036 = vpop.f32.mrb[0].mxu0
  %1037 = vmatprep.mubr.f32.mxu0 0.0
  %1038 = vmatmul.mubr.f32.gmra.mrb[0].mxu0 %v690
  %v1039 = vpop.f32.mrb[0].mxu0
  %v1040 = vadd.f32 %v462, %v1039
  %v1041 = vpop.f32.mrb[0].mxu0
  %1042 = vmatprep.mubr.f32.mxu0 0.0
  %1043 = vmatmul.mubr.f32.gmra.mrb[0].mxu0 %v693
  %v1044 = vpop.f32.mrb[0].mxu0
  %v1045 = vadd.f32 %v467, %v1044
  %v1046 = vpop.f32.mrb[0].mxu0
  %1047 = vmatprep.mubr.f32.mxu0 0.0
  %1048 = vmatmul.mubr.f32.gmra.mrb[0].mxu0 %v696
  %v1049 = vpop.f32.mrb[0].mxu0
  %v1050 = vadd.f32 %v472, %v1049
  %v1051 = vpop.f32.mrb[0].mxu0
  %1052 = vmatprep.mubr.f32.mxu0 0.0
  %1053 = vmatmul.mubr.f32.gmra.mrb[0].mxu0 %v699
  %v1054 = vpop.f32.mrb[0].mxu0
  %v1055 = vadd.f32 %v477, %v1054
  %v1056 = vpop.f32.mrb[0].mxu0
  %1057 = vmatprep.mubr.f32.mxu0 0.0
  %1058 = vmatmul.mubr.f32.gmra.mrb[0].mxu0 %v702
  %v1059 = vpop.f32.mrb[0].mxu0
  %v1060 = vadd.f32 %v482, %v1059
  %v1061 = vpop.f32.mrb[0].mxu0
  %1062 = vmatprep.mubr.f32.mxu0 0.0
  %1063 = vmatmul.mubr.f32.gmra.mrb[0].mxu0 %v705
  %v1064 = vpop.f32.mrb[0].mxu0
  %v1065 = vadd.f32 %v487, %v1064
  %v1066 = vpop.f32.mrb[0].mxu0
  %1067 = vmatprep.mubr.f32.mxu0 0.0
  %1068 = vmatmul.mubr.f32.gmra.mrb[0].mxu0 %v708
  %v1069 = vpop.f32.mrb[0].mxu0
  %v1070 = vadd.f32 %v492, %v1069
  %v1071 = vpop.f32.mrb[0].mxu0
  %1072 = vmatprep.mubr.f32.mxu0 0.0
  %1073 = vmatmul.mubr.f32.gmra.mrb[0].mxu0 %v711
  %v1074 = vpop.f32.mrb[0].mxu0
  %v1075 = vadd.f32 %v497, %v1074
  %v1076 = vpop.f32.mrb[0].mxu0
  %1077 = vmatprep.mubr.f32.mxu0 0.0
  %1078 = vmatmul.mubr.f32.gmra.mrb[0].mxu0 %v714
  %v1079 = vpop.f32.mrb[0].mxu0
  %v1080 = vadd.f32 %v502, %v1079
  %v1081 = vpop.f32.mrb[0].mxu0
  %1082 = vmatprep.mubr.f32.mxu0 0.0
  %1083 = vmatmul.mubr.f32.gmra.mrb[0].mxu0 %v717
  %v1084 = vpop.f32.mrb[0].mxu0
  %v1085 = vadd.f32 %v507, %v1084
  %v1086 = vpop.f32.mrb[0].mxu0
  %1087 = vmatprep.mubr.f32.mxu0 0.0
  %1088 = vmatmul.mubr.f32.gmra.mrb[0].mxu0 %v720
  %v1089 = vpop.f32.mrb[0].mxu0
  %v1090 = vadd.f32 %v512, %v1089
  %v1091 = vpop.f32.mrb[0].mxu0
  %1092 = vmatprep.mubr.f32.mxu0 0.0
  %1093 = vmatmul.mubr.f32.gmra.mrb[0].mxu0 %v723
  %v1094 = vpop.f32.mrb[0].mxu0
  %v1095 = vadd.f32 %v517, %v1094
  %v1096 = vpop.f32.mrb[0].mxu0
  %1097 = vmatprep.mubr.f32.mxu0 0.0
  %1098 = vmatmul.mubr.f32.gmra.mrb[0].mxu0 %v726
  %v1099 = vpop.f32.mrb[0].mxu0
  %v1100 = vadd.f32 %v522, %v1099
  %v1101 = vpop.f32.mrb[0].mxu0
  %1102 = vmatprep.mubr.f32.mxu0 0.0
  %1103 = vmatmul.mubr.f32.gmra.mrb[0].mxu0 %v729
  %v1104 = vpop.f32.mrb[0].mxu0
  %v1105 = vadd.f32 %v527, %v1104
  %v1106 = vpop.f32.mrb[0].mxu0
  %1107 = vmatprep.mubr.f32.mxu0 0.0
  %1108 = vmatmul.mubr.f32.gmra.mrb[0].mxu0 %v732
  %v1109 = vpop.f32.mrb[0].mxu0
  %v1110 = vadd.f32 %v532, %v1109
  %v1111 = vpop.f32.mrb[0].mxu0
  %1112 = vmatprep.mubr.f32.mxu0 0.0
  %1113 = vmatmul.mubr.f32.gmra.mrb[0].mxu0 %v735
  %v1114 = vpop.f32.mrb[0].mxu0
  %v1115 = vadd.f32 %v537, %v1114
  %v1116 = vpop.f32.mrb[0].mxu0
  %1117 = vmatprep.mubr.f32.mxu0 0.0
  %1118 = vmatmul.mubr.f32.gmra.mrb[0].mxu0 %v738
  %v1119 = vpop.f32.mrb[0].mxu0
  %v1120 = vadd.f32 %v542, %v1119
  %v1121 = vpop.f32.mrb[0].mxu0
  %1122 = vmatprep.mubr.f32.mxu0 0.0
  %1123 = vmatmul.mubr.f32.gmra.mrb[0].mxu0 %v741
  %v1124 = vpop.f32.mrb[0].mxu0
  %v1125 = vadd.f32 %v547, %v1124
  %v1126 = vpop.f32.mrb[0].mxu0
  %1127 = vdwg.mxu0
  %v1128 = vld [vmem:[%s4] sm:$0x1]
  %v1130 = vlaneseq
  %v1131 = vshrl.u32 %v1130, 7
  %v1132 = vsub.s32 0, %v1131
  %v1133 = vrot.slane %v1128, %v1132
  %v1135 = vadd.f32 %v810, %v1133
  %v1136 = vadd.f32 %v815, %v1133
  %v1137 = vadd.f32 %v820, %v1133
  %v1138 = vadd.f32 %v825, %v1133
  %v1139 = vadd.f32 %v830, %v1133
  %v1140 = vadd.f32 %v835, %v1133
  %v1141 = vadd.f32 %v840, %v1133
  %v1142 = vadd.f32 %v845, %v1133
  %v1143 = vadd.f32 %v850, %v1133
  %v1144 = vadd.f32 %v855, %v1133
  %v1145 = vadd.f32 %v860, %v1133
  %v1146 = vadd.f32 %v865, %v1133
  %v1147 = vadd.f32 %v870, %v1133
  %v1148 = vadd.f32 %v875, %v1133
  %v1149 = vadd.f32 %v880, %v1133
  %v1150 = vadd.f32 %v885, %v1133
  %v1151 = vadd.f32 %v890, %v1133
  %v1152 = vadd.f32 %v895, %v1133
  %v1153 = vadd.f32 %v900, %v1133
  %v1154 = vadd.f32 %v905, %v1133
  %v1155 = vadd.f32 %v910, %v1133
  %v1156 = vadd.f32 %v915, %v1133
  %v1157 = vadd.f32 %v920, %v1133
  %v1158 = vadd.f32 %v925, %v1133
  %v1159 = vadd.f32 %v930, %v1133
  %v1160 = vadd.f32 %v935, %v1133
  %v1161 = vadd.f32 %v940, %v1133
  %v1162 = vadd.f32 %v945, %v1133
  %v1163 = vadd.f32 %v950, %v1133
  %v1164 = vadd.f32 %v955, %v1133
  %v1165 = vadd.f32 %v960, %v1133
  %v1166 = vadd.f32 %v965, %v1133
  %v1167 = vadd.f32 %v970, %v1133
  %v1168 = vadd.f32 %v975, %v1133
  %v1169 = vadd.f32 %v980, %v1133
  %v1170 = vadd.f32 %v985, %v1133
  %v1171 = vadd.f32 %v990, %v1133
  %v1172 = vadd.f32 %v995, %v1133
  %v1173 = vadd.f32 %v1000, %v1133
  %v1174 = vadd.f32 %v1005, %v1133
  %v1175 = vadd.f32 %v1010, %v1133
  %v1176 = vadd.f32 %v1015, %v1133
  %v1177 = vadd.f32 %v1020, %v1133
  %v1178 = vadd.f32 %v1025, %v1133
  %v1179 = vadd.f32 %v1030, %v1133
  %v1180 = vadd.f32 %v1035, %v1133
  %v1181 = vadd.f32 %v1040, %v1133
  %v1182 = vadd.f32 %v1045, %v1133
  %v1183 = vadd.f32 %v1050, %v1133
  %v1184 = vadd.f32 %v1055, %v1133
  %v1185 = vadd.f32 %v1060, %v1133
  %v1186 = vadd.f32 %v1065, %v1133
  %v1187 = vadd.f32 %v1070, %v1133
  %v1188 = vadd.f32 %v1075, %v1133
  %v1189 = vadd.f32 %v1080, %v1133
  %v1190 = vadd.f32 %v1085, %v1133
  %v1191 = vadd.f32 %v1090, %v1133
  %v1192 = vadd.f32 %v1095, %v1133
  %v1193 = vadd.f32 %v1100, %v1133
  %v1194 = vadd.f32 %v1105, %v1133
  %v1195 = vadd.f32 %v1110, %v1133
  %v1196 = vadd.f32 %v1115, %v1133
  %v1197 = vadd.f32 %v1120, %v1133
  %v1198 = vadd.f32 %v1125, %v1133
  %1199 = vst [vmem:[%s5] sm:$0xff] %v1135
  %1200 = vst [vmem:[%s5 + $0x8] sm:$0xff] %v1136
  %1201 = vst [vmem:[%s5 + $0x10] sm:$0xff] %v1137
  %1202 = vst [vmem:[%s5 + $0x18] sm:$0xff] %v1138
  %1203 = vst [vmem:[%s5 + $0x20] sm:$0xff] %v1139
  %1204 = vst [vmem:[%s5 + $0x28] sm:$0xff] %v1140
  %1205 = vst [vmem:[%s5 + $0x30] sm:$0xff] %v1141
  %1206 = vst [vmem:[%s5 + $0x38] sm:$0xff] %v1142
  %1207 = vst [vmem:[%s5 + $0x40] sm:$0xff] %v1143
  %1208 = vst [vmem:[%s5 + $0x48] sm:$0xff] %v1144
  %1209 = vst [vmem:[%s5 + $0x50] sm:$0xff] %v1145
  %1210 = vst [vmem:[%s5 + $0x58] sm:$0xff] %v1146
  %1211 = vst [vmem:[%s5 + $0x60] sm:$0xff] %v1147
  %1212 = vst [vmem:[%s5 + $0x68] sm:$0xff] %v1148
  %1213 = vst [vmem:[%s5 + $0x70] sm:$0xff] %v1149
  %1214 = vst [vmem:[%s5 + $0x78] sm:$0xff] %v1150
  %1215 = vst [vmem:[%s5 + $0x80] sm:$0xff] %v1151
  %1216 = vst [vmem:[%s5 + $0x88] sm:$0xff] %v1152
  %1217 = vst [vmem:[%s5 + $0x90] sm:$0xff] %v1153
  %1218 = vst [vmem:[%s5 + $0x98] sm:$0xff] %v1154
  %1219 = vst [vmem:[%s5 + $0xa0] sm:$0xff] %v1155
  %1220 = vst [vmem:[%s5 + $0xa8] sm:$0xff] %v1156
  %1221 = vst [vmem:[%s5 + $0xb0] sm:$0xff] %v1157
  %1222 = vst [vmem:[%s5 + $0xb8] sm:$0xff] %v1158
  %1223 = vst [vmem:[%s5 + $0xc0] sm:$0xff] %v1159
  %1224 = vst [vmem:[%s5 + $0xc8] sm:$0xff] %v1160
  %1225 = vst [vmem:[%s5 + $0xd0] sm:$0xff] %v1161
  %1226 = vst [vmem:[%s5 + $0xd8] sm:$0xff] %v1162
  %1227 = vst [vmem:[%s5 + $0xe0] sm:$0xff] %v1163
  %1228 = vst [vmem:[%s5 + $0xe8] sm:$0xff] %v1164
  %1229 = vst [vmem:[%s5 + $0xf0] sm:$0xff] %v1165
  %1230 = vst [vmem:[%s5 + $0xf8] sm:$0xff] %v1166
  %1231 = vst [vmem:[%s5 + $0x100] sm:$0xff] %v1167
  %1232 = vst [vmem:[%s5 + $0x108] sm:$0xff] %v1168
  %1233 = vst [vmem:[%s5 + $0x110] sm:$0xff] %v1169
  %1234 = vst [vmem:[%s5 + $0x118] sm:$0xff] %v1170
  %1235 = vst [vmem:[%s5 + $0x120] sm:$0xff] %v1171
  %1236 = vst [vmem:[%s5 + $0x128] sm:$0xff] %v1172
  %1237 = vst [vmem:[%s5 + $0x130] sm:$0xff] %v1173
  %1238 = vst [vmem:[%s5 + $0x138] sm:$0xff] %v1174
  %1239 = vst [vmem:[%s5 + $0x140] sm:$0xff] %v1175
  %1240 = vst [vmem:[%s5 + $0x148] sm:$0xff] %v1176
  %1241 = vst [vmem:[%s5 + $0x150] sm:$0xff] %v1177
  %1242 = vst [vmem:[%s5 + $0x158] sm:$0xff] %v1178
  %1243 = vst [vmem:[%s5 + $0x160] sm:$0xff] %v1179
  %1244 = vst [vmem:[%s5 + $0x168] sm:$0xff] %v1180
  %1245 = vst [vmem:[%s5 + $0x170] sm:$0xff] %v1181
  %1246 = vst [vmem:[%s5 + $0x178] sm:$0xff] %v1182
  %1247 = vst [vmem:[%s5 + $0x180] sm:$0xff] %v1183
  %1248 = vst [vmem:[%s5 + $0x188] sm:$0xff] %v1184
  %1249 = vst [vmem:[%s5 + $0x190] sm:$0xff] %v1185
  %1250 = vst [vmem:[%s5 + $0x198] sm:$0xff] %v1186
  %1251 = vst [vmem:[%s5 + $0x1a0] sm:$0xff] %v1187
  %1252 = vst [vmem:[%s5 + $0x1a8] sm:$0xff] %v1188
  %1253 = vst [vmem:[%s5 + $0x1b0] sm:$0xff] %v1189
  %1254 = vst [vmem:[%s5 + $0x1b8] sm:$0xff] %v1190
  %1255 = vst [vmem:[%s5 + $0x1c0] sm:$0xff] %v1191
  %1256 = vst [vmem:[%s5 + $0x1c8] sm:$0xff] %v1192
  %1257 = vst [vmem:[%s5 + $0x1d0] sm:$0xff] %v1193
  %1258 = vst [vmem:[%s5 + $0x1d8] sm:$0xff] %v1194
  %1259 = vst [vmem:[%s5 + $0x1e0] sm:$0xff] %v1195
  %1260 = vst [vmem:[%s5 + $0x1e8] sm:$0xff] %v1196
  %1261 = vst [vmem:[%s5 + $0x1f0] sm:$0xff] %v1197
  %1262 = vst [vmem:[%s5 + $0x1f8] sm:$0xff] %v1198
  // Predicated region
  $region22: #{_lambda_.1} parent=0 // pred_check
    _
  $region23: #{_lambda_.1} parent=0 // pred_check_branch
    %1264 = sbr.rel (0) target = $region25
  $region24: #{_lambda_.1} parent=0 // pred_region
    _
  $region25: #{_lambda_.1} parent=0 // pred_fallthru
    _
  // Predicated region
  $region26: #{_lambda_.1} parent=0 // pred_check
    _
  $region27: #{_lambda_.1} parent=0 // pred_check_branch
    %1266 = sbr.rel (0) target = $region29
  $region28: #{_lambda_.1} parent=0 // pred_region
    _
  $region29: #{_lambda_.1} parent=0 // pred_fallthru
    _

</llo_original>
